<compile_context>
chip_gen: v7x
topology: tpu7x:2x2x1
jax: 0.10.0
libtpu: 0.0.40
codegen_flags: <defaults>
</compile_context>

<pallas_src>
import jax
import jax.numpy as jnp
from jax.experimental import pallas as pl
from jax.experimental.pallas import tpu as pltpu

LANE = 128  # TPU lane width


def _mlp_kernel(x_ref, w1_ref, b1_ref, w2_ref, b2_ref, w3_ref, b3_ref, o_ref):
    x = x_ref[...]                                       # bf16 (tile_b, D_in)
    # fc1 + ReLU  (bf16 MXU operands, f32 accumulate, bias+ReLU in f32)
    h1 = jnp.dot(x, w1_ref[...], preferred_element_type=jnp.float32) + b1_ref[...]
    h1 = jnp.maximum(h1, 0.0).astype(w2_ref.dtype)
    # fc2 + ReLU
    h2 = jnp.dot(h1, w2_ref[...], preferred_element_type=jnp.float32) + b2_ref[...]
    h2 = jnp.maximum(h2, 0.0).astype(w3_ref.dtype)
    # fc3 (no activation), lane-dense padded output -> unmasked vst
    out = jnp.dot(h2, w3_ref[...], preferred_element_type=jnp.float32) + b3_ref[...]
    o_ref[...] = out.astype(o_ref.dtype)


def adaptive_controller_forward(x, params, *, tile_b=None,
                                compute_dtype=jnp.bfloat16):
    """x: (B, input_dim) f32.  params: dict of w1,b1,w2,b2,w3,b3 (f32)."""
    w1, b1, w2, b2, w3, b3 = (params[k] for k in ("w1", "b1", "w2", "b2", "w3", "b3"))
    B, D_in = x.shape
    H = w1.shape[1]
    D_out = w3.shape[1]

    # --- batch tiling: one grid step for small B, 512-row tiles for large B --
    if tile_b is None:
        tile_b = B if B <= 512 else 512
    tile_b = max(8, int(tile_b))
    if tile_b % 8:                      # keep the sublane dimension 8-aligned
        tile_b = ((tile_b + 7) // 8) * 8
    n_tiles = pl.cdiv(B, tile_b)
    B_pad = n_tiles * tile_b
    if B_pad != B:                      # ragged batch -> zero-pad rows
        x = jnp.pad(x, ((0, B_pad - B), (0, 0)))
    grid = (n_tiles,)

    # --- lane-dense fc3: pad output features to a multiple of 128 ------------
    N_pad = ((D_out + LANE - 1) // LANE) * LANE
    w3_p = jnp.zeros((H, N_pad), w3.dtype).at[:, :D_out].set(w3)
    b3_p = jnp.zeros((1, N_pad), b3.dtype).at[:, :D_out].set(b3)

    # --- bf16 MXU operands; biases stay f32 (bias+ReLU done in f32) ----------
    xc = x.astype(compute_dtype)
    w1c, w2c, w3c = (w.astype(compute_dtype) for w in (w1, w2, w3_p))
    b1f, b2f, b3f = (b.astype(jnp.float32) for b in (b1, b2, b3_p))

    full = lambda shape: pl.BlockSpec(shape, lambda i: (0, 0))

    itemsize = lambda a: a.size * a.dtype.itemsize
    flops = 2 * B_pad * (D_in * H + H * H + H * N_pad)
    bytes_accessed = (itemsize(xc)
                      + sum(itemsize(a) for a in (w1c, b1f, w2c, b2f, w3c, b3f))
                      + B_pad * N_pad * 4)

    out = pl.pallas_call(
        _mlp_kernel,
        out_shape=jax.ShapeDtypeStruct((B_pad, N_pad), jnp.float32),
        grid_spec=pltpu.PrefetchScalarGridSpec(
            num_scalar_prefetch=0,
            grid=grid,
            in_specs=[
                pl.BlockSpec((tile_b, D_in), lambda i: (i, 0)),   # x tile
                full(w1c.shape), full(b1f.shape),                 # tiny, VMEM-resident
                full(w2c.shape), full(b2f.shape),
                full(w3c.shape), full(b3f.shape),
            ],
            out_specs=pl.BlockSpec((tile_b, N_pad), lambda i: (i, 0)),
        ),
        compiler_params=pltpu.CompilerParams(
            dimension_semantics=("parallel",)),
        cost_estimate=pl.CostEstimate(
            flops=flops, transcendentals=0, bytes_accessed=bytes_accessed),
    )(xc, w1c, b1f, w2c, b2f, w3c, b3f)

    # strip batch padding and the lane padding of fc3
    return out[:B, :D_out]


def init_params(key, input_dim, hidden=64, output_dim=2):
    """Deterministic synthetic init (PyTorch-style uniform bounds)."""
    ks = jax.random.split(key, 6)

    def linear(kw, kb, fan_in, fan_out):
        bound = 1.0 / jnp.sqrt(jnp.float32(fan_in))
        w = jax.random.uniform(kw, (fan_in, fan_out), jnp.float32, -bound, bound)
        b = jax.random.uniform(kb, (1, fan_out), jnp.float32, -bound, bound)
        return w, b

    w1, b1 = linear(ks[0], ks[1], input_dim, hidden)
    w2, b2 = linear(ks[2], ks[3], hidden, hidden)
    w3, b3 = linear(ks[4], ks[5], hidden, output_dim)
    return {"w1": w1, "b1": b1, "w2": w2, "b2": b2, "w3": w3, "b3": b3}


def _reference_f32(x, p):
    h1 = jnp.maximum(x @ p["w1"] + p["b1"], 0.0)
    h2 = jnp.maximum(h1 @ p["w2"] + p["b2"], 0.0)
    return h2 @ p["w3"] + p["b3"]


def _reference_bf16(x, p):
    """Mimics the kernel's bf16-operand / f32-accumulate precision."""
    cd = jnp.bfloat16
    h1 = jnp.dot(x.astype(cd), p["w1"].astype(cd),
                 preferred_element_type=jnp.float32) + p["b1"]
    h1 = jnp.maximum(h1, 0.0).astype(cd)
    h2 = jnp.dot(h1, p["w2"].astype(cd),
                 preferred_element_type=jnp.float32) + p["b2"]
    h2 = jnp.maximum(h2, 0.0).astype(cd)
    return jnp.dot(h2, p["w3"].astype(cd),
                   preferred_element_type=jnp.float32) + p["b3"]


if __name__ == "__main__":
    key = jax.random.PRNGKey(0)
    k_x, k_p, k_x2 = jax.random.split(key, 3)

    batch, input_dim, output_dim = 16, 32, 2
    x = jax.random.normal(k_x, (batch, input_dim), jnp.float32)
    params = init_params(k_p, input_dim, hidden=64, output_dim=output_dim)

    # Small batch -> single grid step, lane-dense padded output.
    out = adaptive_controller_forward(x, params)
    out = jax.block_until_ready(out)
    assert out.shape == (batch, output_dim)

    ref16 = _reference_bf16(x, params)
    ref32 = _reference_f32(x, params)
    assert jnp.allclose(out, ref16, atol=2e-2, rtol=2e-2), "mismatch vs bf16 reference"
    assert jnp.allclose(out, ref32, atol=8e-2, rtol=8e-2), "mismatch vs f32 reference"

    # Ragged batch path (B not a multiple of the tile): exercised via cdiv + pad.
    x2 = jax.random.normal(k_x2, (5, input_dim), jnp.float32)
    out2 = jax.block_until_ready(adaptive_controller_forward(x2, params))
    assert out2.shape == (5, output_dim)
    assert jnp.allclose(out2, _reference_f32(x2, params), atol=8e-2, rtol=8e-2)

    print("KERNEL_OK")
</pallas_src>

<mosaic_0001>
module attributes {stable_mosaic.version = 11 : i64} {
  func.func @_mlp_kernel(%arg0: i32, %arg1: memref<16x32xbf16, #tpu.memory_space<vmem>>, %arg2: memref<32x64xbf16, #tpu.memory_space<vmem>>, %arg3: memref<1x64xf32, #tpu.memory_space<vmem>>, %arg4: memref<64x64xbf16, #tpu.memory_space<vmem>>, %arg5: memref<1x64xf32, #tpu.memory_space<vmem>>, %arg6: memref<64x128xbf16, #tpu.memory_space<vmem>>, %arg7: memref<1x128xf32, #tpu.memory_space<vmem>>, %arg8: memref<16x128xf32, #tpu.memory_space<vmem>>) attributes {dimension_semantics = [#tpu.dimension_semantics<parallel>], iteration_bounds = array<i64: 1>, scalar_prefetch = 0 : i64, scratch_operands = 0 : i64, tpu.core_type = #tpu.core_type<tc>, window_params = [{transform_indices = @transform_0, window_bounds = array<i64: 16, 32>}, {pipeline_mode = #tpu.pipeline_mode<synchronous>, transform_indices = @transform_1, window_bounds = array<i64: 32, 64>}, {pipeline_mode = #tpu.pipeline_mode<synchronous>, transform_indices = @transform_2, window_bounds = array<i64: 1, 64>}, {pipeline_mode = #tpu.pipeline_mode<synchronous>, transform_indices = @transform_3, window_bounds = array<i64: 64, 64>}, {pipeline_mode = #tpu.pipeline_mode<synchronous>, transform_indices = @transform_4, window_bounds = array<i64: 1, 64>}, {pipeline_mode = #tpu.pipeline_mode<synchronous>, transform_indices = @transform_5, window_bounds = array<i64: 64, 128>}, {pipeline_mode = #tpu.pipeline_mode<synchronous>, transform_indices = @transform_6, window_bounds = array<i64: 1, 128>}, {transform_indices = @transform_7, window_bounds = array<i64: 16, 128>}]} {
    %c0 = arith.constant 0 : index
    %c0_0 = arith.constant 0 : index
    %0 = vector.load %arg1[%c0, %c0_0] : memref<16x32xbf16, #tpu.memory_space<vmem>>, vector<16x32xbf16>
    %c0_1 = arith.constant 0 : index
    %c0_2 = arith.constant 0 : index
    %1 = vector.load %arg2[%c0_1, %c0_2] : memref<32x64xbf16, #tpu.memory_space<vmem>>, vector<32x64xbf16>
    %cst = arith.constant dense<0.000000e+00> : vector<16x64xf32>
    %2 = tpu.matmul %0, %1, %cst {dimension_numbers = #tpu.dot_dimension_numbers<[1], [0], [0], [1], [0, 0, 1, 1], [], []>} : vector<16x32xbf16>, vector<32x64xbf16>, vector<16x64xf32> -> vector<16x64xf32>
    %c0_3 = arith.constant 0 : index
    %c0_4 = arith.constant 0 : index
    %3 = vector.load %arg3[%c0_3, %c0_4] : memref<1x64xf32, #tpu.memory_space<vmem>>, vector<1x64xf32>
    %4 = vector.broadcast %3 : vector<1x64xf32> to vector<16x64xf32>
    %5 = arith.addf %2, %4 : vector<16x64xf32>
    %cst_5 = arith.constant 0.000000e+00 : f32
    %6 = vector.broadcast %cst_5 : f32 to vector<16x64xf32>
    %7 = arith.maximumf %5, %6 : vector<16x64xf32>
    %8 = arith.truncf %7 : vector<16x64xf32> to vector<16x64xbf16>
    %c0_6 = arith.constant 0 : index
    %c0_7 = arith.constant 0 : index
    %9 = vector.load %arg4[%c0_6, %c0_7] : memref<64x64xbf16, #tpu.memory_space<vmem>>, vector<64x64xbf16>
    %cst_8 = arith.constant dense<0.000000e+00> : vector<16x64xf32>
    %10 = tpu.matmul %8, %9, %cst_8 {dimension_numbers = #tpu.dot_dimension_numbers<[1], [0], [0], [1], [0, 0, 1, 1], [], []>} : vector<16x64xbf16>, vector<64x64xbf16>, vector<16x64xf32> -> vector<16x64xf32>
    %c0_9 = arith.constant 0 : index
    %c0_10 = arith.constant 0 : index
    %11 = vector.load %arg5[%c0_9, %c0_10] : memref<1x64xf32, #tpu.memory_space<vmem>>, vector<1x64xf32>
    %12 = vector.broadcast %11 : vector<1x64xf32> to vector<16x64xf32>
    %13 = arith.addf %10, %12 : vector<16x64xf32>
    %cst_11 = arith.constant 0.000000e+00 : f32
    %14 = vector.broadcast %cst_11 : f32 to vector<16x64xf32>
    %15 = arith.maximumf %13, %14 : vector<16x64xf32>
    %16 = arith.truncf %15 : vector<16x64xf32> to vector<16x64xbf16>
    %c0_12 = arith.constant 0 : index
    %c0_13 = arith.constant 0 : index
    %17 = vector.load %arg6[%c0_12, %c0_13] : memref<64x128xbf16, #tpu.memory_space<vmem>>, vector<64x128xbf16>
    %cst_14 = arith.constant dense<0.000000e+00> : vector<16x128xf32>
    %18 = tpu.matmul %16, %17, %cst_14 {dimension_numbers = #tpu.dot_dimension_numbers<[1], [0], [0], [1], [0, 0, 1, 1], [], []>} : vector<16x64xbf16>, vector<64x128xbf16>, vector<16x128xf32> -> vector<16x128xf32>
    %c0_15 = arith.constant 0 : index
    %c0_16 = arith.constant 0 : index
    %19 = vector.load %arg7[%c0_15, %c0_16] : memref<1x128xf32, #tpu.memory_space<vmem>>, vector<1x128xf32>
    %20 = vector.broadcast %19 : vector<1x128xf32> to vector<16x128xf32>
    %21 = arith.addf %18, %20 : vector<16x128xf32>
    %c0_17 = arith.constant 0 : index
    %c0_18 = arith.constant 0 : index
    %22 = vector.load %arg8[%c0_17, %c0_18] : memref<16x128xf32, #tpu.memory_space<vmem>>, vector<16x128xf32>
    tpu.vector_store %arg8[%c0_17, %c0_18], %21 {strides = array<i32>} : memref<16x128xf32, #tpu.memory_space<vmem>>, vector<16x128xf32>,
    return
  }
  func.func @transform_0(%arg0: i32) -> (i32, i32) {
    %c0_i32 = arith.constant 0 : i32
    %c0_i32_0 = arith.constant 0 : i32
    return %arg0, %c0_i32 : i32, i32
  }
  func.func @transform_1(%arg0: i32) -> (i32, i32) {
    %c0_i32 = arith.constant 0 : i32
    %c0_i32_0 = arith.constant 0 : i32
    %c0_i32_1 = arith.constant 0 : i32
    return %c0_i32, %c0_i32_0 : i32, i32
  }
  func.func @transform_2(%arg0: i32) -> (i32, i32) {
    %c0_i32 = arith.constant 0 : i32
    %c0_i32_0 = arith.constant 0 : i32
    %c0_i32_1 = arith.constant 0 : i32
    return %c0_i32, %c0_i32_0 : i32, i32
  }
  func.func @transform_3(%arg0: i32) -> (i32, i32) {
    %c0_i32 = arith.constant 0 : i32
    %c0_i32_0 = arith.constant 0 : i32
    %c0_i32_1 = arith.constant 0 : i32
    return %c0_i32, %c0_i32_0 : i32, i32
  }
  func.func @transform_4(%arg0: i32) -> (i32, i32) {
    %c0_i32 = arith.constant 0 : i32
    %c0_i32_0 = arith.constant 0 : i32
    %c0_i32_1 = arith.constant 0 : i32
    return %c0_i32, %c0_i32_0 : i32, i32
  }
  func.func @transform_5(%arg0: i32) -> (i32, i32) {
    %c0_i32 = arith.constant 0 : i32
    %c0_i32_0 = arith.constant 0 : i32
    %c0_i32_1 = arith.constant 0 : i32
    return %c0_i32, %c0_i32_0 : i32, i32
  }
  func.func @transform_6(%arg0: i32) -> (i32, i32) {
    %c0_i32 = arith.constant 0 : i32
    %c0_i32_0 = arith.constant 0 : i32
    %c0_i32_1 = arith.constant 0 : i32
    return %c0_i32, %c0_i32_0 : i32, i32
  }
  func.func @transform_7(%arg0: i32) -> (i32, i32) {
    %c0_i32 = arith.constant 0 : i32
    %c0_i32_0 = arith.constant 0 : i32
    return %arg0, %c0_i32 : i32, i32
  }
}

</mosaic_0001>

<llo_original>
// kernel: tpu_custom_call.1
$region0: #{tpu_custom_call.1}
  #allocation0 [shape = 'u32[]', space=smem, size = 0x4, offset = 0x4, fixed_abs, tag = 'smem constant byte address 0x4 - core index']
  #allocation1 [shape = 'u32[144,128]{1,0:T(1,128)}', space=vmem, size = 0x12000, scoped, tag = 'internal scratch']
  %s0 = inlined_call_operand.hbm [shape: bf16[16,32], index: 0, kind: input, shape index: {}]
  %s1 = inlined_call_operand.hbm [shape: bf16[32,64], index: 1, kind: input, shape index: {}]
  %s2 = inlined_call_operand.vmem [shape: f32[1,64], index: 2, kind: input, shape index: {}]
  %s3 = inlined_call_operand.hbm [shape: bf16[64,64], index: 3, kind: input, shape index: {}]
  %s4 = inlined_call_operand.vmem [shape: f32[1,64], index: 4, kind: input, shape index: {}]
  %s5 = inlined_call_operand.hbm [shape: bf16[64,128], index: 5, kind: input, shape index: {}]
  %s6 = inlined_call_operand.vmem [shape: f32[1,128], index: 6, kind: input, shape index: {}]
  %s7 = inlined_call_operand.hbm [shape: f32[16,128], index: 7, kind: output, shape index: {}]
  %s8 = sld [smem:[#allocation0]]
  $region54: #{tpu_custom_call.1} parent=0
    _
  %s10 = ssub.s32 1, %s8
  %s11 = scalar_select 0, %s10, %s8
  $region1: #{tpu_custom_call.1} parent=0
    #allocation2 [shape = 'u8[4096]{0}', space=vmem, size = 0x1000, scoped, tag = 'input window, operand 0, single buffered']
    #allocation3 [shape = 's32[1]{0}', space=sflag, size = 0x4, scoped, tag = 'scoped memory for tpu_custom_call.1']
    #allocation4 [shape = 's32[1]{0}', space=sflag, size = 0x4, scoped, tag = 'scoped memory for tpu_custom_call.1']
    #allocation5 [shape = 'u8[8192]{0}', space=vmem, size = 0x2000, scoped, tag = 'input window, operand 1, single buffered']
    #allocation6 [shape = 's32[1]{0}', space=sflag, size = 0x4, scoped, tag = 'scoped memory for tpu_custom_call.1']
    #allocation7 [shape = 'u8[16384]{0}', space=vmem, size = 0x4000, scoped, tag = 'input window, operand 3, single buffered']
    #allocation8 [shape = 'u8[16384]{0}', space=vmem, size = 0x4000, scoped, tag = 'input window, operand 5, single buffered']
    #allocation9 [shape = 's32[1]{0}', space=sflag, size = 0x4, scoped, tag = 'scoped memory for tpu_custom_call.1']
    #allocation10 [shape = 'u8[8192]{0}', space=vmem, size = 0x2000, scoped, tag = 'output window, operand 0, single buffered']
    %12 = vsyncpa [#allocation3], 0
    %13 = vsyncpa [#allocation6], 0
    %14 = vsyncpa [#allocation9], 0
    %15 = vsyncpa [#allocation4], 0
    // Predicated region
    $region2: #{tpu_custom_call.1} parent=1 // pred_check
      _
    $region3: #{tpu_custom_call.1} parent=1 // pred_check_branch
      %17 = sbr.rel (0) target = $region5
    $region4: #{tpu_custom_call.1} parent=1 // pred_region
      %s19 = ssub.s32 128, 128
      %20 = vsyncadd [#allocation3], %s19
      %s21 = sshll.u32 [#allocation2], 4
      %s22 = int_to_ptr.vmem [resolvable:$true] %s21
      %27 = dma.hbm_to_vmem [thread:$0]  %s0, 128, %s22, [#allocation3], 64, 64, 4
    $region5: #{tpu_custom_call.1} parent=1 // pred_fallthru
      _
    // Predicated region
    $region6: #{tpu_custom_call.1} parent=1 // pred_check
      _
    $region7: #{tpu_custom_call.1} parent=1 // pred_check_branch
      %29 = sbr.rel (0) target = $region9
    $region8: #{tpu_custom_call.1} parent=1 // pred_region
      %s31 = ssub.s32 256, 256
      %32 = vsyncadd [#allocation6], %s31
      %s33 = sshll.u32 [#allocation5], 4
      %s34 = int_to_ptr.vmem [resolvable:$true] %s33
      %39 = dma.hbm_to_vmem [thread:$0]  %s1, 256, %s34, [#allocation6], 64, 64, 4
    $region9: #{tpu_custom_call.1} parent=1 // pred_fallthru
      _
    // Predicated region
    $region10: #{tpu_custom_call.1} parent=1 // pred_check
      _
    $region11: #{tpu_custom_call.1} parent=1 // pred_check_branch
      %41 = sbr.rel (0) target = $region13
    $region12: #{tpu_custom_call.1} parent=1 // pred_region
      _
    $region13: #{tpu_custom_call.1} parent=1 // pred_fallthru
      _
    // Predicated region
    $region14: #{tpu_custom_call.1} parent=1 // pred_check
      _
    $region15: #{tpu_custom_call.1} parent=1 // pred_check_branch
      %43 = sbr.rel (0) target = $region17
    $region16: #{tpu_custom_call.1} parent=1 // pred_region
      %s45 = ssub.s32 512, 512
      %46 = vsyncadd [#allocation6], %s45
      %s47 = sshll.u32 [#allocation7], 4
      %s48 = int_to_ptr.vmem [resolvable:$true] %s47
      %53 = dma.hbm_to_vmem [thread:$0]  %s3, 512, %s48, [#allocation6], 64, 64, 4
    $region17: #{tpu_custom_call.1} parent=1 // pred_fallthru
      _
    // Predicated region
    $region18: #{tpu_custom_call.1} parent=1 // pred_check
      _
    $region19: #{tpu_custom_call.1} parent=1 // pred_check_branch
      %55 = sbr.rel (0) target = $region21
    $region20: #{tpu_custom_call.1} parent=1 // pred_region
      _
    $region21: #{tpu_custom_call.1} parent=1 // pred_fallthru
      _
    // Predicated region
    $region22: #{tpu_custom_call.1} parent=1 // pred_check
      _
    $region23: #{tpu_custom_call.1} parent=1 // pred_check_branch
      %57 = sbr.rel (0) target = $region25
    $region24: #{tpu_custom_call.1} parent=1 // pred_region
      %s59 = ssub.s32 512, 512
      %60 = vsyncadd [#allocation9], %s59
      %s61 = sshll.u32 [#allocation8], 4
      %s62 = int_to_ptr.vmem [resolvable:$true] %s61
      %67 = dma.hbm_to_vmem [thread:$0]  %s5, 512, %s62, [#allocation9], 64, 64, 4
    $region25: #{tpu_custom_call.1} parent=1 // pred_fallthru
      _
    // Predicated region
    $region26: #{tpu_custom_call.1} parent=1 // pred_check
      _
    $region27: #{tpu_custom_call.1} parent=1 // pred_check_branch
      %69 = sbr.rel (0) target = $region29
    $region28: #{tpu_custom_call.1} parent=1 // pred_region
      _
    $region29: #{tpu_custom_call.1} parent=1 // pred_fallthru
      _
    // Predicated region
    $region30: #{tpu_custom_call.1} parent=1 // pred_check
      _
    $region31: #{tpu_custom_call.1} parent=1 // pred_check_branch
      %71 = sbr.rel (0) target = $region33
    $region32: #{tpu_custom_call.1} parent=1 // pred_region
      %72 = dma.done [#allocation3], 128
    $region33: #{tpu_custom_call.1} parent=1 // pred_fallthru
      _
    // Predicated region
    $region34: #{tpu_custom_call.1} parent=1 // pred_check
      _
    $region35: #{tpu_custom_call.1} parent=1 // pred_check_branch
      %74 = sbr.rel (0) target = $region37
    $region36: #{tpu_custom_call.1} parent=1 // pred_region
      %75 = dma.done [#allocation6], 256
    $region37: #{tpu_custom_call.1} parent=1 // pred_fallthru
      _
    // Predicated region
    $region38: #{tpu_custom_call.1} parent=1 // pred_check
      _
    $region39: #{tpu_custom_call.1} parent=1 // pred_check_branch
      %77 = sbr.rel (0) target = $region41
    $region40: #{tpu_custom_call.1} parent=1 // pred_region
      %78 = dma.done [#allocation6], 512
    $region41: #{tpu_custom_call.1} parent=1 // pred_fallthru
      _
    // Predicated region
    $region42: #{tpu_custom_call.1} parent=1 // pred_check
      _
    $region43: #{tpu_custom_call.1} parent=1 // pred_check_branch
      %80 = sbr.rel (0) target = $region45
    $region44: #{tpu_custom_call.1} parent=1 // pred_region
      %81 = dma.done [#allocation9], 512
    $region45: #{tpu_custom_call.1} parent=1 // pred_fallthru
      _
    %v83 = vld [vmem:[#allocation2] sm:$0xf]
    %v84 = vld [vmem:[#allocation2 + $0x4] sm:$0xf]
    %v85 = vld [vmem:[#allocation5] sm:$0xf]
    %v86 = vld [vmem:[#allocation5 + $0x4] sm:$0xf]
    %v87 = vld [vmem:[#allocation5 + $0x8] sm:$0xf]
    %v88 = vld [vmem:[#allocation5 + $0xc] sm:$0xf]
    %v89 = vld [vmem:[%s2] sm:$0x1]
    %v91 = vlaneseq
    %v92 = vshrl.u32 %v91, 7
    %v93 = vsub.s32 0, %v92
    %v94 = vrot.slane %v89, %v93
    %v98 = vunpack.c.l.b16 %v83
    %v99 = vunpack.c.l.b16 %v84
    %v100 = vpack.c.b16 %v99, %v98
    %v105 = vunpack.c.l.b16 %v85
    %v106 = vunpack.c.l.b16 %v86
    %v107 = vunpack.c.l.b16 %v87
    %v108 = vunpack.c.l.b16 %v88
    %v109 = vpack.c.b16 %v106, %v105
    %v110 = vpack.c.b16 %v108, %v107
    %vm113 = vcmask 261120
    %v115 = vsel %vm113, %v100, 0
    %117 = vmatprep.subr.bf16.mxu0 0
    %118 = vmatpush1.bf16.msra.mxu0 %v109
    %119 = vmatprep.subr.bf16.mxu0 0
    %120 = vmatpush1.bf16.msra.mxu0 %v110
    %121 = vmatprep.subr.bf16.mxu0 0
    %122 = vmatpush1.bf16.msra.mxu0 0
    %123 = vmatprep.subr.bf16.mxu0 0
    %124 = vmatpush1.bf16.msra.mxu0 0
    %125 = vmatprep.subr.bf16.mxu0 0
    %126 = vmatpush1.bf16.msra.mxu0 0
    %127 = vmatprep.subr.bf16.mxu0 0
    %128 = vmatpush1.bf16.msra.mxu0 0
    %129 = vmatprep.subr.bf16.mxu0 0
    %130 = vmatpush1.bf16.msra.mxu0 0
    %131 = vmatprep.subr.bf16.mxu0 0
    %132 = vmatpush1.bf16.msra.mxu0 0
    %133 = vmatprep.subr.bf16.mxu0 0
    %134 = vmatpush1.bf16.msra.mxu0 0
    %135 = vmatprep.subr.bf16.mxu0 0
    %136 = vmatpush1.bf16.msra.mxu0 0
    %137 = vmatprep.subr.bf16.mxu0 0
    %138 = vmatpush1.bf16.msra.mxu0 0
    %139 = vmatprep.subr.bf16.mxu0 0
    %140 = vmatpush1.bf16.msra.mxu0 0
    %141 = vmatprep.subr.bf16.mxu0 0
    %142 = vmatpush1.bf16.msra.mxu0 0
    %143 = vmatprep.subr.bf16.mxu0 0
    %144 = vmatpush1.bf16.msra.mxu0 0
    %145 = vmatprep.subr.bf16.mxu0 0
    %146 = vmatpush1.bf16.msra.mxu0 0
    %147 = vmatprep.subr.bf16.mxu0 0
    %148 = vmatpush1.bf16.msra.mxu0 0
    %149 = vmatprep.mubr.bf16.mxu0 0
    %150 = vmatmul.mubr.bf16.gmra.mrb[0].mxu0 %v115
    %v151 = vpop.f32.mrb[0].mxu0
    %v152 = vadd.f32 %v94, %v151
    %v153 = vpop.f32.mrb[0].mxu0
    %v154 = vpop.f32.mrb[0].mxu0
    %v155 = vadd.f32 %v94, %v154
    %v156 = vpop.f32.mrb[0].mxu0
    %157 = vdwg.mxu0
    %v158 = vmax.f32 %v152, 0.0
    %v159 = vmax.f32 %v155, 0.0
    %v160 = vpack.c.bf16 %v159, %v158
    %v161 = vld [vmem:[#allocation7] sm:$0xf]
    %v162 = vld [vmem:[#allocation7 + $0x4] sm:$0xf]
    %v163 = vld [vmem:[#allocation7 + $0x8] sm:$0xf]
    %v164 = vld [vmem:[#allocation7 + $0xc] sm:$0xf]
    %v165 = vld [vmem:[#allocation7 + $0x10] sm:$0xf]
    %v166 = vld [vmem:[#allocation7 + $0x14] sm:$0xf]
    %v167 = vld [vmem:[#allocation7 + $0x18] sm:$0xf]
    %v168 = vld [vmem:[#allocation7 + $0x1c] sm:$0xf]
    %v169 = vld [vmem:[%s4] sm:$0x1]
    %v171 = vlaneseq
    %v172 = vshrl.u32 %v171, 7
    %v173 = vsub.s32 0, %v172
    %v174 = vrot.slane %v169, %v173
    %v184 = vunpack.c.l.b16 %v161
    %v185 = vunpack.c.l.b16 %v162
    %v186 = vunpack.c.l.b16 %v163
    %v187 = vunpack.c.l.b16 %v164
    %v188 = vunpack.c.l.b16 %v165
    %v189 = vunpack.c.l.b16 %v166
    %v190 = vunpack.c.l.b16 %v167
    %v191 = vunpack.c.l.b16 %v168
    %v192 = vpack.c.b16 %v185, %v184
    %v193 = vpack.c.b16 %v187, %v186
    %v194 = vpack.c.b16 %v189, %v188
    %v195 = vpack.c.b16 %v191, %v190
    %vm200 = vcmask 523264
    %v202 = vsel %vm200, %v160, 0
    %204 = vmatprep.subr.bf16.mxu0 0
    %205 = vmatpush1.bf16.msra.mxu0 %v192
    %206 = vmatprep.subr.bf16.mxu0 0
    %207 = vmatpush1.bf16.msra.mxu0 %v193
    %208 = vmatprep.subr.bf16.mxu0 0
    %209 = vmatpush1.bf16.msra.mxu0 %v194
    %210 = vmatprep.subr.bf16.mxu0 0
    %211 = vmatpush1.bf16.msra.mxu0 %v195
    %212 = vmatprep.subr.bf16.mxu0 0
    %213 = vmatpush1.bf16.msra.mxu0 0
    %214 = vmatprep.subr.bf16.mxu0 0
    %215 = vmatpush1.bf16.msra.mxu0 0
    %216 = vmatprep.subr.bf16.mxu0 0
    %217 = vmatpush1.bf16.msra.mxu0 0
    %218 = vmatprep.subr.bf16.mxu0 0
    %219 = vmatpush1.bf16.msra.mxu0 0
    %220 = vmatprep.subr.bf16.mxu0 0
    %221 = vmatpush1.bf16.msra.mxu0 0
    %222 = vmatprep.subr.bf16.mxu0 0
    %223 = vmatpush1.bf16.msra.mxu0 0
    %224 = vmatprep.subr.bf16.mxu0 0
    %225 = vmatpush1.bf16.msra.mxu0 0
    %226 = vmatprep.subr.bf16.mxu0 0
    %227 = vmatpush1.bf16.msra.mxu0 0
    %228 = vmatprep.subr.bf16.mxu0 0
    %229 = vmatpush1.bf16.msra.mxu0 0
    %230 = vmatprep.subr.bf16.mxu0 0
    %231 = vmatpush1.bf16.msra.mxu0 0
    %232 = vmatprep.subr.bf16.mxu0 0
    %233 = vmatpush1.bf16.msra.mxu0 0
    %234 = vmatprep.subr.bf16.mxu0 0
    %235 = vmatpush1.bf16.msra.mxu0 0
    %236 = vmatprep.mubr.bf16.mxu0 0
    %237 = vmatmul.mubr.bf16.gmra.mrb[0].mxu0 %v202
    %v238 = vpop.f32.mrb[0].mxu0
    %v239 = vadd.f32 %v174, %v238
    %v240 = vpop.f32.mrb[0].mxu0
    %v241 = vpop.f32.mrb[0].mxu0
    %v242 = vadd.f32 %v174, %v241
    %v243 = vpop.f32.mrb[0].mxu0
    %244 = vdwg.mxu0
    %v245 = vmax.f32 %v239, 0.0
    %v246 = vmax.f32 %v242, 0.0
    %v247 = vpack.c.bf16 %v246, %v245
    %v248 = vld [vmem:[#allocation8] sm:$0xf]
    %v249 = vld [vmem:[#allocation8 + $0x4] sm:$0xf]
    %v250 = vld [vmem:[#allocation8 + $0x8] sm:$0xf]
    %v251 = vld [vmem:[#allocation8 + $0xc] sm:$0xf]
    %v252 = vld [vmem:[#allocation8 + $0x10] sm:$0xf]
    %v253 = vld [vmem:[#allocation8 + $0x14] sm:$0xf]
    %v254 = vld [vmem:[#allocation8 + $0x18] sm:$0xf]
    %v255 = vld [vmem:[#allocation8 + $0x1c] sm:$0xf]
    %v256 = vld [vmem:[%s6] sm:$0x1]
    %v258 = vlaneseq
    %v259 = vshrl.u32 %v258, 7
    %v260 = vsub.s32 0, %v259
    %v261 = vrot.slane %v256, %v260
    %v271 = vunpack.c.l.b16 %v248
    %v272 = vunpack.c.l.b16 %v249
    %v273 = vunpack.c.l.b16 %v250
    %v274 = vunpack.c.l.b16 %v251
    %v275 = vunpack.c.l.b16 %v252
    %v276 = vunpack.c.l.b16 %v253
    %v277 = vunpack.c.l.b16 %v254
    %v278 = vunpack.c.l.b16 %v255
    %v279 = vpack.c.b16 %v272, %v271
    %v280 = vpack.c.b16 %v274, %v273
    %v281 = vpack.c.b16 %v276, %v275
    %v282 = vpack.c.b16 %v278, %v277
    %v288 = vsel %vm200, %v247, 0
    %290 = vmatprep.subr.bf16.mxu0 0
    %291 = vmatpush1.bf16.msra.mxu0 %v279
    %292 = vmatprep.subr.bf16.mxu0 0
    %293 = vmatpush1.bf16.msra.mxu0 %v280
    %294 = vmatprep.subr.bf16.mxu0 0
    %295 = vmatpush1.bf16.msra.mxu0 %v281
    %296 = vmatprep.subr.bf16.mxu0 0
    %297 = vmatpush1.bf16.msra.mxu0 %v282
    %298 = vmatprep.subr.bf16.mxu0 0
    %299 = vmatpush1.bf16.msra.mxu0 0
    %300 = vmatprep.subr.bf16.mxu0 0
    %301 = vmatpush1.bf16.msra.mxu0 0
    %302 = vmatprep.subr.bf16.mxu0 0
    %303 = vmatpush1.bf16.msra.mxu0 0
    %304 = vmatprep.subr.bf16.mxu0 0
    %305 = vmatpush1.bf16.msra.mxu0 0
    %306 = vmatprep.subr.bf16.mxu0 0
    %307 = vmatpush1.bf16.msra.mxu0 0
    %308 = vmatprep.subr.bf16.mxu0 0
    %309 = vmatpush1.bf16.msra.mxu0 0
    %310 = vmatprep.subr.bf16.mxu0 0
    %311 = vmatpush1.bf16.msra.mxu0 0
    %312 = vmatprep.subr.bf16.mxu0 0
    %313 = vmatpush1.bf16.msra.mxu0 0
    %314 = vmatprep.subr.bf16.mxu0 0
    %315 = vmatpush1.bf16.msra.mxu0 0
    %316 = vmatprep.subr.bf16.mxu0 0
    %317 = vmatpush1.bf16.msra.mxu0 0
    %318 = vmatprep.subr.bf16.mxu0 0
    %319 = vmatpush1.bf16.msra.mxu0 0
    %320 = vmatprep.subr.bf16.mxu0 0
    %321 = vmatpush1.bf16.msra.mxu0 0
    %322 = vmatprep.mubr.bf16.mxu0 0
    %323 = vmatmul.mubr.bf16.gmra.mrb[0].mxu0 %v288
    %v324 = vpop.f32.mrb[0].mxu0
    %v325 = vadd.f32 %v261, %v324
    %v326 = vpop.f32.mrb[0].mxu0
    %v327 = vpop.f32.mrb[0].mxu0
    %v328 = vadd.f32 %v261, %v327
    %v329 = vpop.f32.mrb[0].mxu0
    %330 = vdwg.mxu0
    %331 = vst [vmem:[#allocation10] sm:$0xff] %v325
    %332 = vst [vmem:[#allocation10 + $0x8] sm:$0xff] %v328
    // Predicated region
    $region46: #{tpu_custom_call.1} parent=1 // pred_check
      _
    $region47: #{tpu_custom_call.1} parent=1 // pred_check_branch
      %334 = sbr.rel (0) target = $region49
    $region48: #{tpu_custom_call.1} parent=1 // pred_region
      %s336 = ssub.s32 256, 256
      %337 = vsyncadd [#allocation4], %s336
      %s338 = sshll.u32 [#allocation10], 4
      %s339 = int_to_ptr.vmem [resolvable:$true] %s338
      %344 = dma.vmem_to_hbm [thread:$0]  %s339, 256, %s7, [#allocation4], 128, 128, 8
    $region49: #{tpu_custom_call.1} parent=1 // pred_fallthru
      _
    // Predicated region
    $region50: #{tpu_custom_call.1} parent=1 // pred_check
      _
    $region51: #{tpu_custom_call.1} parent=1 // pred_check_branch
      %346 = sbr.rel (0) target = $region53
    $region52: #{tpu_custom_call.1} parent=1 // pred_region
      %347 = dma.done [#allocation4], 256
    $region53: #{tpu_custom_call.1} parent=1 // pred_fallthru
      _
    %348 = vsyncpa [#allocation3], 1
    %349 = vsyncpa [#allocation6], 1
    %350 = vsyncpa [#allocation9], 1
    %351 = vsyncpa [#allocation4], 1

</llo_original>
